<compile_context>
chip_gen: v7x
topology: tpu7x:2x2x1
jax: 0.10.0
libtpu: 0.0.40
codegen_flags: <defaults>
</compile_context>

<pallas_src>
import functools

import numpy as np
import jax
import jax.numpy as jnp
from jax import lax
from jax.experimental import pallas as pl
from jax.experimental.pallas import tpu as pltpu


# ----------------------------------------------------------------------------
# pltpu.roll rotation-direction probe.  Resolved once on real hardware; safe
# to call lazily even under an outer jit trace because its inputs are concrete
# (the tiny pallas_call executes eagerly at trace time).
# ----------------------------------------------------------------------------
@functools.lru_cache(maxsize=None)
def _roll_matches_jnp() -> bool:
    """True iff pltpu.roll(x, s, axis) == jnp.roll(x, s, axis)."""
    def probe(x_ref, o_ref):
        o_ref[...] = pltpu.roll(x_ref[...], 1, axis=1)

    x = jnp.broadcast_to(jnp.arange(128, dtype=jnp.float32)[None, :], (8, 128))
    res = pl.pallas_call(
        probe, out_shape=jax.ShapeDtypeStruct((8, 128), jnp.float32))(x)
    # jnp.roll([0,1,...,127], 1)[1] == 0 ; the flipped convention gives 2.
    return float(jax.device_get(res)[0, 1]) == 0.0


def _round_up(v, m):
    return ((v + m - 1) // m) * m


def _vmem_limit_bytes() -> int:
    """Per-generation VMEM budget: ~100 MiB on v5e/v6e, ~54 MiB on v7x."""
    try:
        cap = int(pltpu.get_tpu_info().vmem_capacity_bytes)
    except Exception:              # unknown chip / query unavailable
        cap = 64 * 1024 * 1024     # conservative (v7x-sized) fallback
    return max(32 * 1024 * 1024, min(int(cap * 0.85), 100 * 1024 * 1024))


# ----------------------------------------------------------------------------
# Static helpers: tap shifts on the padded layout, interior mask, tap-major
# weight packing.
# ----------------------------------------------------------------------------
def _tap_shifts(w_pad, lanes, roll_like_jnp):
    """Roll amount per tap so that slab_t[p] == act[p + (ky-1)*Wp + (kx-1)]."""
    shifts = []
    for ky in range(3):
        for kx in range(3):
            o = (ky - 1) * w_pad + (kx - 1)
            shifts.append(((-o) % lanes) if roll_like_jnp else (o % lanes))
    return tuple(shifts)


def _interior_mask(h_img, w_img, hwp):
    """(hwp,) f32: 1 on interior pixels of the (H+2)x(W+2) padded image."""
    w_pad = w_img + 2
    m = np.zeros((hwp,), np.float32)
    for r in range(1, h_img + 1):
        m[r * w_pad + 1: r * w_pad + 1 + w_img] = 1.0
    return m


def _pack_weight(w, seg_sizes, cin_pad=0):
    """PyTorch (Cout, Cin, 3, 3) -> per-segment (Cout, 9*s) bf16 arrays.

    Column ordering of each segment is tap-major / channel-minor (t*s + c),
    matching the in-kernel stacking of the 9 rolled tap slabs.
    """
    cout = w.shape[0]
    if cin_pad:
        w = jnp.pad(w, ((0, 0), (0, cin_pad), (0, 0), (0, 0)))
    pieces, c0 = [], 0
    for s in seg_sizes:
        ws = jnp.transpose(w[:, c0:c0 + s], (0, 2, 3, 1))   # (Cout, 3, 3, s)
        pieces.append(ws.reshape(cout, 9 * s).astype(jnp.bfloat16))
        c0 += s
    return pieces


# ----------------------------------------------------------------------------
# Fused Pallas kernel: entire EESNRRDBNet forward for one batch tile.
# ----------------------------------------------------------------------------
def _eesn_kernel(*refs, nb, shifts, plan, n_groups):
    x_ref, m_ref = refs[0], refs[1]
    wrefs = refs[2:2 + n_groups]          # grouped packed conv weights (bf16)
    b_ref = refs[2 + n_groups]            # all biases, (total_cout, 1) f32
    o_ref = refs[3 + n_groups]
    assert len(refs) == n_groups + 4

    mask = m_ref[...]                     # (1, L) f32, 1 on interior pixels

    def taps(a):
        """(C, L) f32 activation -> (9*C, L) bf16 stack of the 9 shifted taps."""
        ab = a.astype(jnp.bfloat16)       # cast ONCE; rolls & concat stay bf16
        slabs = [ab if s == 0 else pltpu.roll(ab, s, axis=1) for s in shifts]
        return jnp.concatenate(slabs, axis=0)

    step = [0]

    def conv(tap_list):
        """3x3 same-conv over the channel-concat of the given tap slabs."""
        segs, b_off, cout, lrelu = plan[step[0]]
        step[0] += 1
        assert len(tap_list) == len(segs)
        acc = None
        for tp, (gid, r0) in zip(tap_list, segs):
            w = wrefs[gid][r0:r0 + cout, :]     # static 8-aligned row slice
            d = jnp.dot(w, tp, preferred_element_type=jnp.float32)
            acc = d if acc is None else acc + d  # pure accumulation (MRB-ok)
        acc = acc + b_ref[b_off:b_off + cout, :]
        if lrelu:
            acc = jnp.maximum(acc, acc * 0.2)    # LeakyReLU(0.2), 2 VPU ops
        return acc * mask                 # re-zero 1-px border + lane padding

    x_in = x_ref[0]                       # (Cin_p, L) f32, zero-bordered
    fea = conv([taps(x_in)])              # conv_first

    trunk = fea
    for _ in range(nb):                   # RRDB blocks
        rrdb_in = trunk
        cur = trunk
        for _ in range(3):                # 3 x ResidualDenseBlock_5C
            t0 = taps(cur)
            x1 = conv([t0]);                     t1 = taps(x1)
            x2 = conv([t0, t1]);                 t2 = taps(x2)
            x3 = conv([t0, t1, t2]);             t3 = taps(x3)
            x4 = conv([t0, t1, t2, t3]);         t4 = taps(x4)
            x5 = conv([t0, t1, t2, t3, t4])
            cur = x5 * 0.2 + cur
        trunk = cur * 0.2 + rrdb_in

    trunk = conv([taps(trunk)])           # trunk_conv
    fea = fea + trunk
    hr = conv([taps(fea)])                # lrelu(HRconv(fea))
    # NOTE: the reference PyTorch module applies LeakyReLU AFTER conv_last.
    out = conv([taps(hr)])                # lrelu(conv_last(hr))
    assert step[0] == len(plan), (step[0], len(plan))   # trace-time check

    o_ref[...] = out.reshape((1,) + out.shape).astype(o_ref.dtype)


# ----------------------------------------------------------------------------
# Wrapper: pack/consolidate weights, build padded lane-dense layout, run the
# fused kernel.
# ----------------------------------------------------------------------------
def eesn_rrdbnet_forward(params, x_nchw, *, batch_tile=1, roll_like_jnp=None):
    n, in_nc, h_img, w_img = x_nchw.shape
    nf = params["conv_first"]["w"].shape[0]
    gc = params["rrdb"][0][0]["conv1"]["w"].shape[0]
    nb = len(params["rrdb"])
    out_nc = params["conv_last"]["w"].shape[0]
    assert nf % 8 == 0 and gc % 8 == 0, "nf and gc must be multiples of 8"
    in_p = max(8, _round_up(in_nc, 8))
    out_p = max(8, _round_up(out_nc, 8))

    # Padded-spatial layout: (H+2)*(W+2) flattened, lane-padded to 128.
    h_pad, w_pad = h_img + 2, w_img + 2
    hwp_raw = h_pad * w_pad
    hwp = _round_up(hwp_raw, 128)

    bt = max(1, min(int(batch_tile), n))
    assert n % bt == 0, "batch_tile must divide the batch size"
    lanes = bt * hwp                       # matmul N per dot

    if roll_like_jnp is None:
        roll_like_jnp = _roll_matches_jnp()
    shifts = _tap_shifts(w_pad, lanes, roll_like_jnp)
    mask2d = jnp.asarray(
        np.tile(_interior_mask(h_img, w_img, hwp), bt)).reshape(1, lanes)

    # --- consolidate packed weights (grouped by contraction width) & biases.
    groups = {}                            # width -> {"gid", "rows", "arrays"}
    width_order = []
    plan = []
    bias_rows = []
    bias_off = 0

    def add_conv(w, b, seg_sizes, cin_pad=0, cout_pad=0, lrelu=False):
        nonlocal bias_off
        pieces = _pack_weight(w, seg_sizes, cin_pad)
        cout = int(w.shape[0]) + cout_pad
        segs = []
        for piece, s in zip(pieces, seg_sizes):
            if cout_pad:
                piece = jnp.pad(piece, ((0, cout_pad), (0, 0)))
            width = 9 * s
            if width not in groups:
                groups[width] = {"gid": len(width_order), "rows": 0, "arrays": []}
                width_order.append(width)
            g = groups[width]
            segs.append((g["gid"], g["rows"]))
            g["arrays"].append(piece)
            g["rows"] += cout
        bb = b if cout_pad == 0 else jnp.pad(b, (0, cout_pad))
        bias_rows.append(bb.reshape(-1, 1).astype(jnp.float32))
        plan.append((tuple(segs), bias_off, cout, lrelu))
        bias_off += cout

    add_conv(params["conv_first"]["w"], params["conv_first"]["b"], [in_p],
             cin_pad=in_p - in_nc)
    for rdbs in params["rrdb"]:
        for blk in rdbs:
            add_conv(blk["conv1"]["w"], blk["conv1"]["b"], [nf], lrelu=True)
            add_conv(blk["conv2"]["w"], blk["conv2"]["b"], [nf, gc], lrelu=True)
            add_conv(blk["conv3"]["w"], blk["conv3"]["b"], [nf, gc, gc],
                     lrelu=True)
            add_conv(blk["conv4"]["w"], blk["conv4"]["b"], [nf, gc, gc, gc],
                     lrelu=True)
            add_conv(blk["conv5"]["w"], blk["conv5"]["b"], [nf, gc, gc, gc, gc])
    add_conv(params["trunk_conv"]["w"], params["trunk_conv"]["b"], [nf])
    add_conv(params["HRconv"]["w"], params["HRconv"]["b"], [nf], lrelu=True)
    add_conv(params["conv_last"]["w"], params["conv_last"]["b"], [nf],
             cout_pad=out_p - out_nc, lrelu=True)

    wbufs = [jnp.concatenate(groups[wd]["arrays"], axis=0) for wd in width_order]
    bias_all = jnp.concatenate(bias_rows, axis=0)

    # --- input relayout: zero 1-px spatial border, channel pad, lane pad,
    #     and batch_tile elements laid side by side along lanes.
    xf = x_nchw.astype(jnp.float32)
    xf = jnp.pad(xf, ((0, 0), (0, in_p - in_nc), (1, 1), (1, 1)))
    xf = xf.reshape(n, in_p, hwp_raw)
    xf = jnp.pad(xf, ((0, 0), (0, 0), (0, hwp - hwp_raw)))
    xg = xf.reshape(n // bt, bt, in_p, hwp).transpose(0, 2, 1, 3)
    xg = xg.reshape(n // bt, in_p, lanes)

    kernel = functools.partial(_eesn_kernel, nb=nb, shifts=shifts,
                               plan=tuple(plan), n_groups=len(wbufs))

    in_specs = ([pl.BlockSpec((1, in_p, lanes), lambda i: (i, 0, 0)),
                 pl.BlockSpec((1, lanes), lambda i: (0, 0))]
                + [pl.BlockSpec(w.shape, lambda i: (0, 0)) for w in wbufs]
                + [pl.BlockSpec(bias_all.shape, lambda i: (0, 0))])

    out = pl.pallas_call(
        kernel,
        out_shape=jax.ShapeDtypeStruct((n // bt, out_p, lanes), jnp.float32),
        grid_spec=pltpu.PrefetchScalarGridSpec(
            num_scalar_prefetch=0,
            grid=(n // bt,),
            in_specs=in_specs,
            out_specs=pl.BlockSpec((1, out_p, lanes), lambda i: (i, 0, 0)),
        ),
        compiler_params=pltpu.CompilerParams(
            dimension_semantics=("parallel",),
            vmem_limit_bytes=_vmem_limit_bytes(),
        ),
    )(xg, mask2d, *wbufs, bias_all)

    # --- undo the lane packing and extract the interior.
    y = out.reshape(n // bt, out_p, bt, hwp).transpose(0, 2, 1, 3)
    y = y.reshape(n, out_p, hwp)[:, :out_nc, :hwp_raw]
    y = y.reshape(n, out_nc, h_pad, w_pad)[:, :, 1:1 + h_img, 1:1 + w_img]
    return y                               # NCHW, like PyTorch


# ----------------------------------------------------------------------------
# Parameter construction (deterministic, synthetic — no checkpoint loading)
# ----------------------------------------------------------------------------
def _make_conv_params(key, cin, cout, scale=0.1):
    kw, kb = jax.random.split(key)
    w = jax.random.normal(kw, (cout, cin, 3, 3), jnp.float32) * scale
    # Keep weights bf16-representable so the bf16-input kernel and the f32
    # reference use identical effective weights.
    w = w.astype(jnp.bfloat16).astype(jnp.float32)
    b = jax.random.normal(kb, (cout,), jnp.float32) * 0.01
    return {"w": w, "b": b}


def init_params(key, in_nc, out_nc, nf, nb, gc):
    keys = iter(jax.random.split(key, 6 + nb * 15))
    params = {
        "conv_first": _make_conv_params(next(keys), in_nc, nf),
        "trunk_conv": _make_conv_params(next(keys), nf, nf),
        # upconv1 / upconv2 exist in __init__ but are unused in forward().
        "upconv1": _make_conv_params(next(keys), nf, nf),
        "upconv2": _make_conv_params(next(keys), nf, nf),
        "HRconv": _make_conv_params(next(keys), nf, nf),
        "conv_last": _make_conv_params(next(keys), nf, out_nc),
        "rrdb": [],
    }
    for _ in range(nb):
        rdbs = []
        for _ in range(3):          # each RRDB has 3 ResidualDenseBlock_5C
            rdbs.append({
                "conv1": _make_conv_params(next(keys), nf, gc),
                "conv2": _make_conv_params(next(keys), nf + gc, gc),
                "conv3": _make_conv_params(next(keys), nf + 2 * gc, gc),
                "conv4": _make_conv_params(next(keys), nf + 3 * gc, gc),
                "conv5": _make_conv_params(next(keys), nf + 4 * gc, nf),
            })
        params["rrdb"].append(rdbs)
    return params


# ----------------------------------------------------------------------------
# Pure-JAX reference (XLA conv), mirroring the kernel's numerics: conv inputs
# rounded to bf16, weights bf16-representable, f32 accumulation.
# ----------------------------------------------------------------------------
def _ref_conv3x3(x_nhwc, weight, bias, apply_lrelu):
    xq = x_nhwc.astype(jnp.bfloat16).astype(jnp.float32)
    w = jnp.transpose(weight, (2, 3, 1, 0))                 # HWIO
    y = lax.conv_general_dilated(
        xq, w, window_strides=(1, 1), padding="SAME",
        dimension_numbers=("NHWC", "HWIO", "NHWC"),
        precision=lax.Precision.HIGHEST)
    y = y + bias
    if apply_lrelu:
        y = jnp.where(y >= 0, y, y * 0.2)
    return y


def _ref_forward(params, x_nchw):
    x = jnp.transpose(x_nchw, (0, 2, 3, 1))
    fea = _ref_conv3x3(x, params["conv_first"]["w"], params["conv_first"]["b"],
                       False)
    trunk = fea
    for rdbs in params["rrdb"]:
        rrdb_in = trunk
        cur = trunk
        for p in rdbs:
            xx = cur
            x1 = _ref_conv3x3(xx, p["conv1"]["w"], p["conv1"]["b"], True)
            x2 = _ref_conv3x3(jnp.concatenate([xx, x1], -1),
                              p["conv2"]["w"], p["conv2"]["b"], True)
            x3 = _ref_conv3x3(jnp.concatenate([xx, x1, x2], -1),
                              p["conv3"]["w"], p["conv3"]["b"], True)
            x4 = _ref_conv3x3(jnp.concatenate([xx, x1, x2, x3], -1),
                              p["conv4"]["w"], p["conv4"]["b"], True)
            x5 = _ref_conv3x3(jnp.concatenate([xx, x1, x2, x3, x4], -1),
                              p["conv5"]["w"], p["conv5"]["b"], False)
            cur = x5 * 0.2 + xx
        trunk = cur * 0.2 + rrdb_in
    trunk = _ref_conv3x3(trunk, params["trunk_conv"]["w"],
                         params["trunk_conv"]["b"], False)
    fea = fea + trunk
    hr = _ref_conv3x3(fea, params["HRconv"]["w"], params["HRconv"]["b"], True)
    out = _ref_conv3x3(hr, params["conv_last"]["w"], params["conv_last"]["b"],
                       True)
    return jnp.transpose(out, (0, 3, 1, 2))


# ----------------------------------------------------------------------------
if __name__ == "__main__":
    # Small config consistent with the module: in_nc=4, out_nc=4, nf=16, nb=1, gc=8
    in_nc, out_nc, nf, nb, gc = 4, 4, 16, 1, 8
    N, H, W = 2, 16, 16

    key = jax.random.PRNGKey(0)
    k_params, k_x = jax.random.split(key)
    params = init_params(k_params, in_nc, out_nc, nf, nb, gc)
    x = jax.random.normal(k_x, (N, in_nc, H, W), jnp.float32)   # NCHW input

    # Resolve the pltpu.roll direction once, eagerly, and bake it in as a
    # static flag (addresses the "cold-trace probe" review concern).
    roll_like_jnp = _roll_matches_jnp()

    # batch_tile=2: both batch elements packed along lanes so each MXU dot
    # sees N = 2*(H+2)*(W+2) lanes (recommended for toy spatial sizes).
    fwd = jax.jit(functools.partial(eesn_rrdbnet_forward,
                                    batch_tile=2,
                                    roll_like_jnp=roll_like_jnp))
    y = jax.block_until_ready(fwd(params, x))

    y_ref = jax.block_until_ready(_ref_forward(params, x))
    assert y.shape == (N, out_nc, H, W), y.shape
    err = float(jnp.max(jnp.abs(y - y_ref)))
    assert jnp.allclose(y, y_ref, atol=5e-3, rtol=5e-3), err

    print("KERNEL_OK")
</pallas_src>

<mosaic_0001>
module attributes {stable_mosaic.version = 11 : i64} {
  func.func @probe(%arg0: memref<8x128xf32, #tpu.memory_space<vmem>>, %arg1: memref<8x128xf32, #tpu.memory_space<vmem>>) attributes {dimension_semantics = [], scalar_prefetch = 0 : i64, scratch_operands = 0 : i64, tpu.core_type = #tpu.core_type<tc>} {
    %c0 = arith.constant 0 : index
    %c0_0 = arith.constant 0 : index
    %0 = vector.load %arg0[%c0, %c0_0] : memref<8x128xf32, #tpu.memory_space<vmem>>, vector<8x128xf32>
    %c1_i32 = arith.constant 1 : i32
    %1 = tpu.dynamic_rotate %0 by %c1_i32 dim 1 : vector<8x128xf32>, i32 -> vector<8x128xf32>
    %c0_1 = arith.constant 0 : index
    %c0_2 = arith.constant 0 : index
    %2 = vector.load %arg1[%c0_1, %c0_2] : memref<8x128xf32, #tpu.memory_space<vmem>>, vector<8x128xf32>
    tpu.vector_store %arg1[%c0_1, %c0_2], %1 {strides = array<i32>} : memref<8x128xf32, #tpu.memory_space<vmem>>, vector<8x128xf32>,
    return
  }
}

</mosaic_0001>

<llo_original>
// kernel: tpu_custom_call.1
$region0: #{tpu_custom_call.1}
  #allocation0 [shape = 'u32[]', space=smem, size = 0x4, offset = 0x4, fixed_abs, tag = 'smem constant byte address 0x4 - core index']
  #allocation1 [shape = 'u32[144,128]{1,0:T(1,128)}', space=vmem, size = 0x12000, scoped, tag = 'internal scratch']
  %s0 = inlined_call_operand.hbm [shape: f32[8,128], index: 0, kind: input, shape index: {}]
  %s1 = inlined_call_operand.hbm [shape: f32[8,128], index: 1, kind: output, shape index: {}]
  %s2 = sld [smem:[#allocation0]]
  $region18: #{tpu_custom_call.1} parent=0
    _
  %s4 = ssub.s32 1, %s2
  %s5 = scalar_select 0, %s4, %s2
  $region1: #{tpu_custom_call.1} parent=0
    #allocation2 [shape = 'u8[4096]{0}', space=vmem, size = 0x1000, scoped, tag = 'input window, operand 0, single buffered']
    #allocation3 [shape = 's32[1]{0}', space=sflag, size = 0x4, scoped, tag = 'scoped memory for tpu_custom_call.1']
    #allocation4 [shape = 's32[1]{0}', space=sflag, size = 0x4, scoped, tag = 'scoped memory for tpu_custom_call.1']
    #allocation5 [shape = 'u8[4096]{0}', space=vmem, size = 0x1000, scoped, tag = 'output window, operand 0, single buffered']
    %6 = vsyncpa [#allocation3], 0
    %7 = vsyncpa [#allocation4], 0
    // Predicated region
    $region2: #{tpu_custom_call.1} parent=1 // pred_check
      _
    $region3: #{tpu_custom_call.1} parent=1 // pred_check_branch
      %9 = sbr.rel (0) target = $region5
    $region4: #{tpu_custom_call.1} parent=1 // pred_region
      %s11 = ssub.s32 128, 128
      %12 = vsyncadd [#allocation3], %s11
      %s14 = sshll.u32 [#allocation2], 4
      %s15 = int_to_ptr.vmem [resolvable:$true] %s14
      %17 = dma.hbm_to_vmem [thread:$0]  %s0, 128, %s15, [#allocation3]
    $region5: #{tpu_custom_call.1} parent=1 // pred_fallthru
      _
    // Predicated region
    $region6: #{tpu_custom_call.1} parent=1 // pred_check
      _
    $region7: #{tpu_custom_call.1} parent=1 // pred_check_branch
      %19 = sbr.rel (0) target = $region9
    $region8: #{tpu_custom_call.1} parent=1 // pred_region
      %20 = dma.done [#allocation3], 128
    $region9: #{tpu_custom_call.1} parent=1 // pred_fallthru
      _
    %v21 = vld [vmem:[#allocation2] sm:$0xff]
    %22 = vrot.lane.b32.xlu0 %v21, 1
    %v23 = vpop.permute.xlu0 %22
    %24 = vst [vmem:[#allocation5] sm:$0xff] %v23
    // Predicated region
    $region10: #{tpu_custom_call.1} parent=1 // pred_check
      _
    $region11: #{tpu_custom_call.1} parent=1 // pred_check_branch
      %26 = sbr.rel (0) target = $region13
    $region12: #{tpu_custom_call.1} parent=1 // pred_region
      %s28 = ssub.s32 128, 128
      %29 = vsyncadd [#allocation4], %s28
      %s31 = sshll.u32 [#allocation5], 4
      %s32 = int_to_ptr.vmem [resolvable:$true] %s31
      %34 = dma.vmem_to_hbm [thread:$0]  %s32, 128, %s1, [#allocation4]
    $region13: #{tpu_custom_call.1} parent=1 // pred_fallthru
      _
    // Predicated region
    $region14: #{tpu_custom_call.1} parent=1 // pred_check
      _
    $region15: #{tpu_custom_call.1} parent=1 // pred_check_branch
      %36 = sbr.rel (0) target = $region17
    $region16: #{tpu_custom_call.1} parent=1 // pred_region
      %37 = dma.done [#allocation4], 128
    $region17: #{tpu_custom_call.1} parent=1 // pred_fallthru
      _
    %38 = vsyncpa [#allocation3], 1
    %39 = vsyncpa [#allocation4], 1

</llo_original>
